<compile_context>
chip_gen: v7x
topology: tpu7x:2x2x1
jax: 0.10.0
libtpu: 0.0.40
codegen_flags: <defaults>
</compile_context>

<pallas_src>
import jax
import jax.numpy as jnp
from jax.experimental import pallas as pl
from jax.experimental.pallas import tpu as pltpu


_MIB = 1 << 20
_SMALL_COPY_BYTES = 256 * 1024   # below this, use a plain XLA copy


def _copy_kernel(x_ref, o_ref):
    # Identity: copy the current VMEM tile input -> output (full-width vst).
    o_ref[...] = x_ref[...]


def _round_up(v: int, m: int) -> int:
    return ((v + m - 1) // m) * m


def _hw_params():
    """(block_bytes, vmem_limit_bytes) tuned per TPU generation."""
    try:
        vmem_cap = int(pltpu.get_tpu_info().vmem_capacity_bytes)
    except Exception:
        vmem_cap = 64 * _MIB                 # conservative: v7x per-TC VMEM
    if vmem_cap >= 128 * _MIB:               # v5e / v6e
        block_bytes = 8 * _MIB
    else:                                    # v7x
        block_bytes = 4 * _MIB
    # Double-buffered in + out = 4 * block_bytes; leave headroom but never ask
    # for more than ~3/4 of physical VMEM.
    vmem_limit = min(4 * block_bytes + 16 * _MIB, (vmem_cap * 3) // 4)
    return block_bytes, int(vmem_limit)


def _choose_cols(n: int):
    """Pick a lane-dense slab width.  Returns (cols, flat_padding)."""
    for c in (1024, 512, 256, 128):
        if n % c == 0:
            return c, 0
    c = 1024
    return c, (-n) % c


def _pallas_copy_2d(x2: jax.Array) -> jax.Array:
    rows, cols = x2.shape
    itemsize = jnp.dtype(x2.dtype).itemsize
    block_bytes, vmem_limit = _hw_params()

    # Sublane quantum for packed dtypes: 8 (f32), 16 (bf16), 32 (int8/fp8).
    row_q = 8 * max(1, 4 // itemsize)

    # Constant-byte block: rows scale with dtype width.
    tm = max(row_q, (block_bytes // (cols * itemsize)) // row_q * row_q)
    tm = min(tm, _round_up(rows, row_q))

    # v7x megacore: prefer >=2 row-blocks (one per TensorCore) as long as each
    # block stays >= ~1 MiB so per-step pipeline overhead remains amortized.
    while (pl.cdiv(rows, tm) < 2
           and tm % (2 * row_q) == 0
           and (tm // 2) * cols * itemsize >= _MIB):
        tm //= 2

    grid = (pl.cdiv(rows, tm),)

    return pl.pallas_call(
        _copy_kernel,
        out_shape=jax.ShapeDtypeStruct((rows, cols), x2.dtype),
        grid_spec=pltpu.PrefetchScalarGridSpec(
            num_scalar_prefetch=0,
            grid=grid,
            in_specs=[pl.BlockSpec((tm, cols), lambda i: (i, 0))],
            out_specs=pl.BlockSpec((tm, cols), lambda i: (i, 0)),
        ),
        compiler_params=pltpu.CompilerParams(
            dimension_semantics=("parallel",),
            vmem_limit_bytes=vmem_limit,
        ),
        cost_estimate=pl.CostEstimate(
            flops=0,
            transcendentals=0,
            bytes_accessed=2 * rows * cols * itemsize,
        ),
    )(x2)


def passthrough(x: jax.Array, *, materialize: bool = False,
                min_kernel_bytes: int = _SMALL_COPY_BYTES) -> jax.Array:
    """Forward pass of `Passthrough`.

    Default: return `x` unchanged — identical to the PyTorch module's
    `return x` and the fastest possible identity (zero HBM traffic).

    materialize=True: return a fresh buffer.  Tensors >= `min_kernel_bytes`
    are copied through the tiled, lane-dense Pallas kernel; smaller (or empty)
    tensors use a plain XLA copy (Pallas launch overhead would dominate).
    """
    if not materialize:
        return x

    orig_shape = x.shape
    n = x.size
    itemsize = jnp.dtype(x.dtype).itemsize
    if n == 0 or n * itemsize < min_kernel_bytes:
        return jnp.copy(x)

    flat = x.reshape(-1)
    cols, pad = _choose_cols(n)
    if pad:
        # TODO(synk): padding + slice-back adds one extra XLA copy; only taken
        # when the element count is not a multiple of 128 (rare in practice).
        flat = jnp.pad(flat, (0, pad))
    rows = flat.size // cols

    out = _pallas_copy_2d(flat.reshape(rows, cols)).reshape(-1)
    if pad:
        out = out[:n]
    return out.reshape(orig_shape)


if __name__ == "__main__":
    key = jax.random.PRNGKey(0)
    # Shape consistent with a typical NCHW activation feeding a projection head.
    x = jax.random.normal(key, (2, 4, 16, 16), dtype=jnp.float32)

    # 1) Fast path: true identity, no data movement (what the nn.Module does).
    y = jax.block_until_ready(passthrough(x))
    assert y.shape == x.shape and y.dtype == x.dtype
    assert bool(jnp.array_equal(y, x)), "Passthrough (fast path) differs"

    # 2) Materialized copy, small tensor -> plain XLA copy path.
    y = jax.block_until_ready(passthrough(x, materialize=True))
    assert y.shape == x.shape and y.dtype == x.dtype
    assert bool(jnp.array_equal(y, x)), "Passthrough (XLA copy path) differs"

    # 3) Force the Pallas kernel (lane-aligned: 2048 elements -> 2x1024 slab).
    y = jax.block_until_ready(passthrough(x, materialize=True, min_kernel_bytes=0))
    assert y.shape == x.shape and y.dtype == x.dtype
    assert bool(jnp.array_equal(y, x)), "Passthrough (kernel path) differs"

    # 4) bf16 through the kernel (dtype-scaled block sizing).
    x2 = jax.random.normal(key, (2, 8, 32), dtype=jnp.bfloat16)
    y2 = jax.block_until_ready(passthrough(x2, materialize=True, min_kernel_bytes=0))
    assert y2.shape == x2.shape and y2.dtype == x2.dtype
    assert bool(jnp.array_equal(y2, x2)), "Passthrough (bf16 kernel path) differs"

    # 5) Element count NOT a multiple of 128 -> pad-in-flat-space kernel path.
    x3 = jax.random.normal(key, (3, 5, 7), dtype=jnp.float32)
    y3 = jax.block_until_ready(passthrough(x3, materialize=True, min_kernel_bytes=0))
    assert y3.shape == x3.shape and y3.dtype == x3.dtype
    assert bool(jnp.array_equal(y3, x3)), "Passthrough (padded kernel path) differs"

    print("KERNEL_OK")
</pallas_src>

<mosaic_0001>
module attributes {stable_mosaic.version = 11 : i64} {
  func.func @_copy_kernel(%arg0: i32, %arg1: memref<8x1024xf32, #tpu.memory_space<vmem>>, %arg2: memref<8x1024xf32, #tpu.memory_space<vmem>>) attributes {dimension_semantics = [#tpu.dimension_semantics<parallel>], iteration_bounds = array<i64: 1>, scalar_prefetch = 0 : i64, scratch_operands = 0 : i64, tpu.core_type = #tpu.core_type<tc>, window_params = [{transform_indices = @transform_0, window_bounds = array<i64: 8, 1024>}, {transform_indices = @transform_1, window_bounds = array<i64: 8, 1024>}]} {
    %c0 = arith.constant 0 : index
    %c0_0 = arith.constant 0 : index
    %0 = vector.load %arg1[%c0, %c0_0] : memref<8x1024xf32, #tpu.memory_space<vmem>>, vector<8x1024xf32>
    %c0_1 = arith.constant 0 : index
    %c0_2 = arith.constant 0 : index
    %1 = vector.load %arg2[%c0_1, %c0_2] : memref<8x1024xf32, #tpu.memory_space<vmem>>, vector<8x1024xf32>
    tpu.vector_store %arg2[%c0_1, %c0_2], %0 {strides = array<i32>} : memref<8x1024xf32, #tpu.memory_space<vmem>>, vector<8x1024xf32>,
    return
  }
  func.func @transform_0(%arg0: i32) -> (i32, i32) {
    %c0_i32 = arith.constant 0 : i32
    %c0_i32_0 = arith.constant 0 : i32
    return %arg0, %c0_i32 : i32, i32
  }
  func.func @transform_1(%arg0: i32) -> (i32, i32) {
    %c0_i32 = arith.constant 0 : i32
    %c0_i32_0 = arith.constant 0 : i32
    return %arg0, %c0_i32 : i32, i32
  }
}

</mosaic_0001>

<llo_original>
// kernel: tpu_custom_call.1
$region0: #{tpu_custom_call.1}
  #allocation0 [shape = 'u32[]', space=smem, size = 0x4, offset = 0x4, fixed_abs, tag = 'smem constant byte address 0x4 - core index']
  #allocation1 [shape = 'u32[144,128]{1,0:T(1,128)}', space=vmem, size = 0x12000, scoped, tag = 'internal scratch']
  %s0 = inlined_call_operand.hbm [shape: f32[2,1024], index: 0, kind: input, shape index: {}]
  %s1 = inlined_call_operand.hbm [shape: f32[2,1024], index: 1, kind: output, shape index: {}]
  %s2 = sld [smem:[#allocation0]]
  $region18: #{tpu_custom_call.1} parent=0
    _
  %s4 = ssub.s32 1, %s2
  %s5 = scalar_select 0, %s4, %s2
  $region1: #{tpu_custom_call.1} parent=0
    #allocation2 [shape = 'u8[32768]{0}', space=vmem, size = 0x8000, scoped, tag = 'input window, operand 0, single buffered']
    #allocation3 [shape = 's32[1]{0}', space=sflag, size = 0x4, scoped, tag = 'scoped memory for tpu_custom_call.1']
    #allocation4 [shape = 's32[1]{0}', space=sflag, size = 0x4, scoped, tag = 'scoped memory for tpu_custom_call.1']
    #allocation5 [shape = 'u8[32768]{0}', space=vmem, size = 0x8000, scoped, tag = 'output window, operand 0, single buffered']
    %6 = vsyncpa [#allocation3], 0
    %7 = vsyncpa [#allocation4], 0
    // Predicated region
    $region2: #{tpu_custom_call.1} parent=1 // pred_check
      _
    $region3: #{tpu_custom_call.1} parent=1 // pred_check_branch
      %9 = sbr.rel (0) target = $region5
    $region4: #{tpu_custom_call.1} parent=1 // pred_region
      %s11 = ssub.s32 1024, 256
      %12 = vsyncadd [#allocation3], %s11
      %s13 = sshll.u32 [#allocation2], 4
      %s14 = int_to_ptr.vmem [resolvable:$true] %s13
      %19 = dma.hbm_to_vmem [thread:$0]  %s0, 256, %s14, [#allocation3], 256, 256, 16
    $region5: #{tpu_custom_call.1} parent=1 // pred_fallthru
      _
    // Predicated region
    $region6: #{tpu_custom_call.1} parent=1 // pred_check
      _
    $region7: #{tpu_custom_call.1} parent=1 // pred_check_branch
      %21 = sbr.rel (0) target = $region9
    $region8: #{tpu_custom_call.1} parent=1 // pred_region
      %22 = dma.done [#allocation3], 1024
    $region9: #{tpu_custom_call.1} parent=1 // pred_fallthru
      _
    %v23 = vld [vmem:[#allocation2] sm:$0xff]
    %v24 = vld [vmem:[#allocation2 + $0x8] sm:$0xff]
    %v25 = vld [vmem:[#allocation2 + $0x10] sm:$0xff]
    %v26 = vld [vmem:[#allocation2 + $0x18] sm:$0xff]
    %v27 = vld [vmem:[#allocation2 + $0x20] sm:$0xff]
    %v28 = vld [vmem:[#allocation2 + $0x28] sm:$0xff]
    %v29 = vld [vmem:[#allocation2 + $0x30] sm:$0xff]
    %v30 = vld [vmem:[#allocation2 + $0x38] sm:$0xff]
    %31 = vst [vmem:[#allocation5] sm:$0xff] %v23
    %32 = vst [vmem:[#allocation5 + $0x8] sm:$0xff] %v24
    %33 = vst [vmem:[#allocation5 + $0x10] sm:$0xff] %v25
    %34 = vst [vmem:[#allocation5 + $0x18] sm:$0xff] %v26
    %35 = vst [vmem:[#allocation5 + $0x20] sm:$0xff] %v27
    %36 = vst [vmem:[#allocation5 + $0x28] sm:$0xff] %v28
    %37 = vst [vmem:[#allocation5 + $0x30] sm:$0xff] %v29
    %38 = vst [vmem:[#allocation5 + $0x38] sm:$0xff] %v30
    // Predicated region
    $region10: #{tpu_custom_call.1} parent=1 // pred_check
      _
    $region11: #{tpu_custom_call.1} parent=1 // pred_check_branch
      %40 = sbr.rel (0) target = $region13
    $region12: #{tpu_custom_call.1} parent=1 // pred_region
      %s42 = ssub.s32 1024, 256
      %43 = vsyncadd [#allocation4], %s42
      %s44 = sshll.u32 [#allocation5], 4
      %s45 = int_to_ptr.vmem [resolvable:$true] %s44
      %50 = dma.vmem_to_hbm [thread:$0]  %s45, 256, %s1, [#allocation4], 256, 256, 16
    $region13: #{tpu_custom_call.1} parent=1 // pred_fallthru
      _
    // Predicated region
    $region14: #{tpu_custom_call.1} parent=1 // pred_check
      _
    $region15: #{tpu_custom_call.1} parent=1 // pred_check_branch
      %52 = sbr.rel (0) target = $region17
    $region16: #{tpu_custom_call.1} parent=1 // pred_region
      %53 = dma.done [#allocation4], 1024
    $region17: #{tpu_custom_call.1} parent=1 // pred_fallthru
      _
    %54 = vsyncpa [#allocation3], 1
    %55 = vsyncpa [#allocation4], 1

</llo_original>
